<compile_context>
chip_gen: v7x
topology: tpu7x:2x2x1
jax: 0.10.0
libtpu: 0.0.40
codegen_flags: <defaults>
</compile_context>

<pallas_src>
import jax
import jax.numpy as jnp
from jax import lax
from jax.experimental import pallas as pl
from jax.experimental.pallas import tpu as pltpu

EPS = 1e-5


def add_layernorm_kernel(x_ref, y_ref, gamma_ref, beta_ref, o_ref):
    # x_ref, y_ref, o_ref: [tile_n, C] ; gamma_ref, beta_ref: [1, C]
    s = x_ref[...].astype(jnp.float32) + y_ref[...].astype(jnp.float32)
    inv_c = jnp.float32(1.0 / s.shape[-1])

    # Two independent lane reductions (overlap on the XLU), then cheap VPU
    # scalar math; avoids the serial reduce -> broadcast-sub -> reduce chain
    # and any per-row divides (rsqrt goes to the EUP slot).
    sum_s = jnp.sum(s, axis=-1, keepdims=True)
    sum_sq = jnp.sum(s * s, axis=-1, keepdims=True)
    mean = sum_s * inv_c
    var = sum_sq * inv_c - mean * mean
    inv = lax.rsqrt(var + EPS)

    g = gamma_ref[...].astype(jnp.float32)
    b = beta_ref[...].astype(jnp.float32)
    # Plain (un-folded) affine: 4 full-slab VPU passes, broadcast operands only.
    o_ref[...] = (((s - mean) * inv) * g + b).astype(o_ref.dtype)


def add_layernorm(x, y, gamma, beta, *, row_tile=512, small_n_threshold=1024):
    """x, y: [..., C]; gamma, beta: [C]. Returns same shape/dtype as x."""
    orig_shape = x.shape
    C = orig_shape[-1]
    N = 1
    for d in orig_shape[:-1]:
        N *= d

    x2 = x.reshape(N, C)
    y2 = y.reshape(N, C)
    g2 = gamma.reshape(1, C)
    b2 = beta.reshape(1, C)

    if N <= small_n_threshold:
        # Small-N path (this module: N = 196): a single whole-array block.
        # block_shape == array shape is legal even though 196 % 8 != 0, and
        # avoids per-grid-step overhead (which would exceed the DMA time).
        grid = (1,)
        in_specs = [
            pl.BlockSpec((N, C), lambda i: (0, 0)),
            pl.BlockSpec((N, C), lambda i: (0, 0)),
            pl.BlockSpec((1, C), lambda i: (0, 0)),
            pl.BlockSpec((1, C), lambda i: (0, 0)),
        ]
        out_specs = pl.BlockSpec((N, C), lambda i: (0, 0))
        dim_sem = ("arbitrary",)
    else:
        # Large-N path: 8/128-aligned row tiles, cdiv grid (ragged last block
        # is read-padded / store-masked by Pallas; LayerNorm is row-wise so
        # pad rows are harmless).  Rows are independent -> "parallel" lets the
        # grid shard across TensorCores (v7x megacore) and pipeline vs HBM.
        grid = (pl.cdiv(N, row_tile),)
        in_specs = [
            pl.BlockSpec((row_tile, C), lambda i: (i, 0)),
            pl.BlockSpec((row_tile, C), lambda i: (i, 0)),
            pl.BlockSpec((1, C), lambda i: (0, 0)),
            pl.BlockSpec((1, C), lambda i: (0, 0)),
        ]
        out_specs = pl.BlockSpec((row_tile, C), lambda i: (i, 0))
        dim_sem = ("parallel",)

    out2 = pl.pallas_call(
        add_layernorm_kernel,
        out_shape=jax.ShapeDtypeStruct((N, C), x.dtype),
        grid_spec=pl.GridSpec(
            grid=grid,
            in_specs=in_specs,
            out_specs=out_specs,
        ),
        # x364 (= x + y) is not needed separately downstream; let the output
        # reuse x's buffer.
        input_output_aliases={0: 0},
        compiler_params=pltpu.CompilerParams(dimension_semantics=dim_sem),
    )(x2, y2, g2, b2)

    return out2.reshape(orig_shape)


def _reference(x, y, gamma, beta):
    s = x + y
    mean = jnp.mean(s, axis=-1, keepdims=True)
    var = jnp.mean((s - mean) ** 2, axis=-1, keepdims=True)
    return (s - mean) / jnp.sqrt(var + EPS) * gamma + beta


if __name__ == "__main__":
    key = jax.random.PRNGKey(0)
    k1, k2, k3, k4 = jax.random.split(key, 4)

    C = 512
    # PyTorch default LayerNorm init: gamma = 1, beta = 0 (deterministic).
    gamma = jnp.ones((C,), dtype=jnp.float32)
    beta = jnp.zeros((C,), dtype=jnp.float32)

    # --- Module shape: [1, 14, 14, 512] -> N = 196 (small-N single-block path)
    B, H, W = 1, 14, 14
    x356 = jax.random.normal(k1, (B, H, W, C), dtype=jnp.float32)
    x363 = jax.random.normal(k2, (B, H, W, C), dtype=jnp.float32)

    ref_small = _reference(x356, x363, gamma, beta)  # compute before (aliasing)
    out_small = add_layernorm(x356, x363, gamma, beta)
    out_small = jax.block_until_ready(out_small)
    assert out_small.shape == (B, H, W, C)
    assert jnp.allclose(out_small, ref_small, atol=1e-4, rtol=1e-4)

    # --- Large-N path with ragged last block: N = 1600 (grid = cdiv(1600, 512) = 4)
    Hl, Wl = 40, 40
    xl = jax.random.normal(k3, (1, Hl, Wl, C), dtype=jnp.float32)
    yl = jax.random.normal(k4, (1, Hl, Wl, C), dtype=jnp.float32)

    ref_large = _reference(xl, yl, gamma, beta)
    out_large = add_layernorm(xl, yl, gamma, beta)
    out_large = jax.block_until_ready(out_large)
    assert out_large.shape == (1, Hl, Wl, C)
    assert jnp.allclose(out_large, ref_large, atol=1e-4, rtol=1e-4)

    print("KERNEL_OK")
</pallas_src>

<mosaic_0001>
module attributes {stable_mosaic.version = 11 : i64} {
  func.func @add_layernorm_kernel(%arg0: i32, %arg1: memref<196x512xf32, #tpu.memory_space<vmem>>, %arg2: memref<196x512xf32, #tpu.memory_space<vmem>>, %arg3: memref<1x512xf32, #tpu.memory_space<vmem>>, %arg4: memref<1x512xf32, #tpu.memory_space<vmem>>, %arg5: memref<196x512xf32, #tpu.memory_space<vmem>>) attributes {dimension_semantics = [#tpu.dimension_semantics<arbitrary>], iteration_bounds = array<i64: 1>, scalar_prefetch = 0 : i64, scratch_operands = 0 : i64, tpu.core_type = #tpu.core_type<tc>, window_params = [{pipeline_mode = #tpu.pipeline_mode<synchronous>, transform_indices = @transform_0, window_bounds = array<i64: 196, 512>}, {pipeline_mode = #tpu.pipeline_mode<synchronous>, transform_indices = @transform_1, window_bounds = array<i64: 196, 512>}, {pipeline_mode = #tpu.pipeline_mode<synchronous>, transform_indices = @transform_2, window_bounds = array<i64: 1, 512>}, {pipeline_mode = #tpu.pipeline_mode<synchronous>, transform_indices = @transform_3, window_bounds = array<i64: 1, 512>}, {pipeline_mode = #tpu.pipeline_mode<synchronous>, transform_indices = @transform_4, window_bounds = array<i64: 196, 512>}]} {
    %c0 = arith.constant 0 : index
    %c0_0 = arith.constant 0 : index
    %0 = vector.load %arg1[%c0, %c0_0] : memref<196x512xf32, #tpu.memory_space<vmem>>, vector<196x512xf32>
    %c0_1 = arith.constant 0 : index
    %c0_2 = arith.constant 0 : index
    %1 = vector.load %arg2[%c0_1, %c0_2] : memref<196x512xf32, #tpu.memory_space<vmem>>, vector<196x512xf32>
    %2 = arith.addf %0, %1 : vector<196x512xf32>
    %cst = arith.constant dense<0.000000e+00> : vector<196xf32>
    %3 = vector.multi_reduction <add>, %2, %cst [1] : vector<196x512xf32> to vector<196xf32>
    %4 = vector.shape_cast %3 : vector<196xf32> to vector<196x1xf32>
    %5 = arith.mulf %2, %2 : vector<196x512xf32>
    %cst_3 = arith.constant dense<0.000000e+00> : vector<196xf32>
    %6 = vector.multi_reduction <add>, %5, %cst_3 [1] : vector<196x512xf32> to vector<196xf32>
    %7 = vector.shape_cast %6 : vector<196xf32> to vector<196x1xf32>
    %cst_4 = arith.constant 0.001953125 : f32
    %8 = vector.broadcast %cst_4 : f32 to vector<196x1xf32>
    %9 = arith.mulf %4, %8 : vector<196x1xf32>
    %cst_5 = arith.constant 0.001953125 : f32
    %10 = vector.broadcast %cst_5 : f32 to vector<196x1xf32>
    %11 = arith.mulf %7, %10 : vector<196x1xf32>
    %12 = arith.mulf %9, %9 : vector<196x1xf32>
    %13 = arith.subf %11, %12 : vector<196x1xf32>
    %cst_6 = arith.constant 9.99999974E-6 : f32
    %14 = vector.broadcast %cst_6 : f32 to vector<196x1xf32>
    %15 = arith.addf %13, %14 : vector<196x1xf32>
    %16 = math.rsqrt %15 : vector<196x1xf32>
    %c0_7 = arith.constant 0 : index
    %c0_8 = arith.constant 0 : index
    %17 = vector.load %arg3[%c0_7, %c0_8] : memref<1x512xf32, #tpu.memory_space<vmem>>, vector<1x512xf32>
    %c0_9 = arith.constant 0 : index
    %c0_10 = arith.constant 0 : index
    %18 = vector.load %arg4[%c0_9, %c0_10] : memref<1x512xf32, #tpu.memory_space<vmem>>, vector<1x512xf32>
    %19 = vector.broadcast %9 : vector<196x1xf32> to vector<196x512xf32>
    %20 = arith.subf %2, %19 : vector<196x512xf32>
    %21 = vector.broadcast %16 : vector<196x1xf32> to vector<196x512xf32>
    %22 = arith.mulf %20, %21 : vector<196x512xf32>
    %23 = vector.broadcast %17 : vector<1x512xf32> to vector<196x512xf32>
    %24 = arith.mulf %22, %23 : vector<196x512xf32>
    %25 = vector.broadcast %18 : vector<1x512xf32> to vector<196x512xf32>
    %26 = arith.addf %24, %25 : vector<196x512xf32>
    %c0_11 = arith.constant 0 : index
    %c0_12 = arith.constant 0 : index
    %27 = vector.load %arg5[%c0_11, %c0_12] : memref<196x512xf32, #tpu.memory_space<vmem>>, vector<196x512xf32>
    tpu.vector_store %arg5[%c0_11, %c0_12], %26 {strides = array<i32>} : memref<196x512xf32, #tpu.memory_space<vmem>>, vector<196x512xf32>,
    return
  }
  func.func @transform_0(%arg0: i32) -> (i32, i32) {
    %c0_i32 = arith.constant 0 : i32
    %c0_i32_0 = arith.constant 0 : i32
    %c0_i32_1 = arith.constant 0 : i32
    return %c0_i32, %c0_i32_0 : i32, i32
  }
  func.func @transform_1(%arg0: i32) -> (i32, i32) {
    %c0_i32 = arith.constant 0 : i32
    %c0_i32_0 = arith.constant 0 : i32
    %c0_i32_1 = arith.constant 0 : i32
    return %c0_i32, %c0_i32_0 : i32, i32
  }
  func.func @transform_2(%arg0: i32) -> (i32, i32) {
    %c0_i32 = arith.constant 0 : i32
    %c0_i32_0 = arith.constant 0 : i32
    %c0_i32_1 = arith.constant 0 : i32
    return %c0_i32, %c0_i32_0 : i32, i32
  }
  func.func @transform_3(%arg0: i32) -> (i32, i32) {
    %c0_i32 = arith.constant 0 : i32
    %c0_i32_0 = arith.constant 0 : i32
    %c0_i32_1 = arith.constant 0 : i32
    return %c0_i32, %c0_i32_0 : i32, i32
  }
  func.func @transform_4(%arg0: i32) -> (i32, i32) {
    %c0_i32 = arith.constant 0 : i32
    %c0_i32_0 = arith.constant 0 : i32
    %c0_i32_1 = arith.constant 0 : i32
    return %c0_i32, %c0_i32_0 : i32, i32
  }
}

</mosaic_0001>

<llo_original>
// kernel: tpu_custom_call.1
$region0: #{tpu_custom_call.1}
  #allocation0 [shape = 'u32[]', space=smem, size = 0x4, offset = 0x4, fixed_abs, tag = 'smem constant byte address 0x4 - core index']
  #allocation1 [shape = 'u32[144,128]{1,0:T(1,128)}', space=vmem, size = 0x12000, scoped, tag = 'internal scratch']
  %s0 = inlined_call_operand.hbm [shape: f32[196,512], index: 0, kind: input, shape index: {}, may-alias: {0,4}]
  %s1 = inlined_call_operand.vmem [shape: f32[196,512], index: 1, kind: input, shape index: {}]
  %s2 = inlined_call_operand.vmem [shape: f32[1,512], index: 2, kind: input, shape index: {}]
  %s3 = inlined_call_operand.vmem [shape: f32[1,512], index: 3, kind: input, shape index: {}]
  %s4 = inlined_call_operand.hbm [shape: f32[196,512], index: 4, kind: output, shape index: {}, may-alias: {0,4}]
  %s5 = sld [smem:[#allocation0]]
  $region30: #{tpu_custom_call.1} parent=0
    _
  %s7 = ssub.s32 1, %s5
  %s8 = scalar_select 0, %s7, %s5
  $region1: #{tpu_custom_call.1} parent=0
    #allocation2 [shape = 'u8[409600]{0}', space=vmem, size = 0x64000, scoped, tag = 'input window, operand 0, single buffered']
    #allocation3 [shape = 's32[1]{0}', space=sflag, size = 0x4, scoped, tag = 'scoped memory for tpu_custom_call.1']
    #allocation4 [shape = 's32[1]{0}', space=sflag, size = 0x4, scoped, tag = 'scoped memory for tpu_custom_call.1']
    #allocation5 [shape = 'u8[409600]{0}', space=vmem, size = 0x64000, scoped, tag = 'output window, operand 0, single buffered']
    %9 = vsyncpa [#allocation3], 0
    %10 = vsyncpa [#allocation4], 0
    // Predicated region
    $region2: #{tpu_custom_call.1} parent=1 // pred_check
      _
    $region3: #{tpu_custom_call.1} parent=1 // pred_check_branch
      %12 = sbr.rel (0) target = $region5
    $region4: #{tpu_custom_call.1} parent=1 // pred_region
      %s14 = ssub.s32 12800, 12800
      %15 = vsyncadd [#allocation3], %s14
      %s16 = sshll.u32 [#allocation2], 4
      %s17 = int_to_ptr.vmem [resolvable:$true] %s16
      %22 = dma.hbm_to_vmem [thread:$0]  %s0, 12800, %s17, [#allocation3], 512, 512, 32
    $region5: #{tpu_custom_call.1} parent=1 // pred_fallthru
      _
    // Predicated region
    $region6: #{tpu_custom_call.1} parent=1 // pred_check
      _
    $region7: #{tpu_custom_call.1} parent=1 // pred_check_branch
      %24 = sbr.rel (0) target = $region9
    $region8: #{tpu_custom_call.1} parent=1 // pred_region
      _
    $region9: #{tpu_custom_call.1} parent=1 // pred_fallthru
      _
    // Predicated region
    $region10: #{tpu_custom_call.1} parent=1 // pred_check
      _
    $region11: #{tpu_custom_call.1} parent=1 // pred_check_branch
      %26 = sbr.rel (0) target = $region13
    $region12: #{tpu_custom_call.1} parent=1 // pred_region
      _
    $region13: #{tpu_custom_call.1} parent=1 // pred_fallthru
      _
    // Predicated region
    $region14: #{tpu_custom_call.1} parent=1 // pred_check
      _
    $region15: #{tpu_custom_call.1} parent=1 // pred_check_branch
      %28 = sbr.rel (0) target = $region17
    $region16: #{tpu_custom_call.1} parent=1 // pred_region
      _
    $region17: #{tpu_custom_call.1} parent=1 // pred_fallthru
      _
    // Predicated region
    $region18: #{tpu_custom_call.1} parent=1 // pred_check
      _
    $region19: #{tpu_custom_call.1} parent=1 // pred_check_branch
      %30 = sbr.rel (0) target = $region21
    $region20: #{tpu_custom_call.1} parent=1 // pred_region
      %31 = dma.done [#allocation3], 12800
    $region21: #{tpu_custom_call.1} parent=1 // pred_fallthru
      _
    %v32 = vld [vmem:[#allocation2] sm:$0xff]
    %v33 = vld [vmem:[#allocation2 + $0x8] sm:$0xff]
    %v34 = vld [vmem:[#allocation2 + $0x10] sm:$0xff]
    %v35 = vld [vmem:[#allocation2 + $0x18] sm:$0xff]
    %v36 = vld [vmem:[#allocation2 + $0x20] sm:$0xff]
    %v37 = vld [vmem:[#allocation2 + $0x28] sm:$0xff]
    %v38 = vld [vmem:[#allocation2 + $0x30] sm:$0xff]
    %v39 = vld [vmem:[#allocation2 + $0x38] sm:$0xff]
    %v40 = vld [vmem:[#allocation2 + $0x40] sm:$0xff]
    %v41 = vld [vmem:[#allocation2 + $0x48] sm:$0xff]
    %v42 = vld [vmem:[#allocation2 + $0x50] sm:$0xff]
    %v43 = vld [vmem:[#allocation2 + $0x58] sm:$0xff]
    %v44 = vld [vmem:[#allocation2 + $0x60] sm:$0xff]
    %v45 = vld [vmem:[#allocation2 + $0x68] sm:$0xff]
    %v46 = vld [vmem:[#allocation2 + $0x70] sm:$0xff]
    %v47 = vld [vmem:[#allocation2 + $0x78] sm:$0xff]
    %v48 = vld [vmem:[#allocation2 + $0x80] sm:$0xff]
    %v49 = vld [vmem:[#allocation2 + $0x88] sm:$0xff]
    %v50 = vld [vmem:[#allocation2 + $0x90] sm:$0xff]
    %v51 = vld [vmem:[#allocation2 + $0x98] sm:$0xff]
    %v52 = vld [vmem:[#allocation2 + $0xa0] sm:$0xff]
    %v53 = vld [vmem:[#allocation2 + $0xa8] sm:$0xff]
    %v54 = vld [vmem:[#allocation2 + $0xb0] sm:$0xff]
    %v55 = vld [vmem:[#allocation2 + $0xb8] sm:$0xff]
    %v56 = vld [vmem:[#allocation2 + $0xc0] sm:$0xff]
    %v57 = vld [vmem:[#allocation2 + $0xc8] sm:$0xff]
    %v58 = vld [vmem:[#allocation2 + $0xd0] sm:$0xff]
    %v59 = vld [vmem:[#allocation2 + $0xd8] sm:$0xff]
    %v60 = vld [vmem:[#allocation2 + $0xe0] sm:$0xff]
    %v61 = vld [vmem:[#allocation2 + $0xe8] sm:$0xff]
    %v62 = vld [vmem:[#allocation2 + $0xf0] sm:$0xff]
    %v63 = vld [vmem:[#allocation2 + $0xf8] sm:$0xff]
    %v64 = vld [vmem:[#allocation2 + $0x100] sm:$0xff]
    %v65 = vld [vmem:[#allocation2 + $0x108] sm:$0xff]
    %v66 = vld [vmem:[#allocation2 + $0x110] sm:$0xff]
    %v67 = vld [vmem:[#allocation2 + $0x118] sm:$0xff]
    %v68 = vld [vmem:[#allocation2 + $0x120] sm:$0xff]
    %v69 = vld [vmem:[#allocation2 + $0x128] sm:$0xff]
    %v70 = vld [vmem:[#allocation2 + $0x130] sm:$0xff]
    %v71 = vld [vmem:[#allocation2 + $0x138] sm:$0xff]
    %v72 = vld [vmem:[#allocation2 + $0x140] sm:$0xff]
    %v73 = vld [vmem:[#allocation2 + $0x148] sm:$0xff]
    %v74 = vld [vmem:[#allocation2 + $0x150] sm:$0xff]
    %v75 = vld [vmem:[#allocation2 + $0x158] sm:$0xff]
    %v76 = vld [vmem:[#allocation2 + $0x160] sm:$0xff]
    %v77 = vld [vmem:[#allocation2 + $0x168] sm:$0xff]
    %v78 = vld [vmem:[#allocation2 + $0x170] sm:$0xff]
    %v79 = vld [vmem:[#allocation2 + $0x178] sm:$0xff]
    %v80 = vld [vmem:[#allocation2 + $0x180] sm:$0xff]
    %v81 = vld [vmem:[#allocation2 + $0x188] sm:$0xff]
    %v82 = vld [vmem:[#allocation2 + $0x190] sm:$0xff]
    %v83 = vld [vmem:[#allocation2 + $0x198] sm:$0xff]
    %v84 = vld [vmem:[#allocation2 + $0x1a0] sm:$0xff]
    %v85 = vld [vmem:[#allocation2 + $0x1a8] sm:$0xff]
    %v86 = vld [vmem:[#allocation2 + $0x1b0] sm:$0xff]
    %v87 = vld [vmem:[#allocation2 + $0x1b8] sm:$0xff]
    %v88 = vld [vmem:[#allocation2 + $0x1c0] sm:$0xff]
    %v89 = vld [vmem:[#allocation2 + $0x1c8] sm:$0xff]
    %v90 = vld [vmem:[#allocation2 + $0x1d0] sm:$0xff]
    %v91 = vld [vmem:[#allocation2 + $0x1d8] sm:$0xff]
    %v92 = vld [vmem:[#allocation2 + $0x1e0] sm:$0xff]
    %v93 = vld [vmem:[#allocation2 + $0x1e8] sm:$0xff]
    %v94 = vld [vmem:[#allocation2 + $0x1f0] sm:$0xff]
    %v95 = vld [vmem:[#allocation2 + $0x1f8] sm:$0xff]
    %v96 = vld [vmem:[#allocation2 + $0x200] sm:$0xff]
    %v97 = vld [vmem:[#allocation2 + $0x208] sm:$0xff]
    %v98 = vld [vmem:[#allocation2 + $0x210] sm:$0xff]
    %v99 = vld [vmem:[#allocation2 + $0x218] sm:$0xff]
    %v100 = vld [vmem:[#allocation2 + $0x220] sm:$0xff]
    %v101 = vld [vmem:[#allocation2 + $0x228] sm:$0xff]
    %v102 = vld [vmem:[#allocation2 + $0x230] sm:$0xff]
    %v103 = vld [vmem:[#allocation2 + $0x238] sm:$0xff]
    %v104 = vld [vmem:[#allocation2 + $0x240] sm:$0xff]
    %v105 = vld [vmem:[#allocation2 + $0x248] sm:$0xff]
    %v106 = vld [vmem:[#allocation2 + $0x250] sm:$0xff]
    %v107 = vld [vmem:[#allocation2 + $0x258] sm:$0xff]
    %v108 = vld [vmem:[#allocation2 + $0x260] sm:$0xff]
    %v109 = vld [vmem:[#allocation2 + $0x268] sm:$0xff]
    %v110 = vld [vmem:[#allocation2 + $0x270] sm:$0xff]
    %v111 = vld [vmem:[#allocation2 + $0x278] sm:$0xff]
    %v112 = vld [vmem:[#allocation2 + $0x280] sm:$0xff]
    %v113 = vld [vmem:[#allocation2 + $0x288] sm:$0xff]
    %v114 = vld [vmem:[#allocation2 + $0x290] sm:$0xff]
    %v115 = vld [vmem:[#allocation2 + $0x298] sm:$0xff]
    %v116 = vld [vmem:[#allocation2 + $0x2a0] sm:$0xff]
    %v117 = vld [vmem:[#allocation2 + $0x2a8] sm:$0xff]
    %v118 = vld [vmem:[#allocation2 + $0x2b0] sm:$0xff]
    %v119 = vld [vmem:[#allocation2 + $0x2b8] sm:$0xff]
    %v120 = vld [vmem:[#allocation2 + $0x2c0] sm:$0xff]
    %v121 = vld [vmem:[#allocation2 + $0x2c8] sm:$0xff]
    %v122 = vld [vmem:[#allocation2 + $0x2d0] sm:$0xff]
    %v123 = vld [vmem:[#allocation2 + $0x2d8] sm:$0xff]
    %v124 = vld [vmem:[#allocation2 + $0x2e0] sm:$0xff]
    %v125 = vld [vmem:[#allocation2 + $0x2e8] sm:$0xff]
    %v126 = vld [vmem:[#allocation2 + $0x2f0] sm:$0xff]
    %v127 = vld [vmem:[#allocation2 + $0x2f8] sm:$0xff]
    %v128 = vld [vmem:[#allocation2 + $0x300] sm:$0xf]
    %v129 = vld [vmem:[#allocation2 + $0x308] sm:$0xf]
    %v130 = vld [vmem:[#allocation2 + $0x310] sm:$0xf]
    %v131 = vld [vmem:[#allocation2 + $0x318] sm:$0xf]
    %v132 = vld [vmem:[%s1] sm:$0xff]
    %v133 = vld [vmem:[%s1 + $0x8] sm:$0xff]
    %v134 = vld [vmem:[%s1 + $0x10] sm:$0xff]
    %v135 = vld [vmem:[%s1 + $0x18] sm:$0xff]
    %v136 = vld [vmem:[%s1 + $0x20] sm:$0xff]
    %v137 = vld [vmem:[%s1 + $0x28] sm:$0xff]
    %v138 = vld [vmem:[%s1 + $0x30] sm:$0xff]
    %v139 = vld [vmem:[%s1 + $0x38] sm:$0xff]
    %v140 = vld [vmem:[%s1 + $0x40] sm:$0xff]
    %v141 = vld [vmem:[%s1 + $0x48] sm:$0xff]
    %v142 = vld [vmem:[%s1 + $0x50] sm:$0xff]
    %v143 = vld [vmem:[%s1 + $0x58] sm:$0xff]
    %v144 = vld [vmem:[%s1 + $0x60] sm:$0xff]
    %v145 = vld [vmem:[%s1 + $0x68] sm:$0xff]
    %v146 = vld [vmem:[%s1 + $0x70] sm:$0xff]
    %v147 = vld [vmem:[%s1 + $0x78] sm:$0xff]
    %v148 = vld [vmem:[%s1 + $0x80] sm:$0xff]
    %v149 = vld [vmem:[%s1 + $0x88] sm:$0xff]
    %v150 = vld [vmem:[%s1 + $0x90] sm:$0xff]
    %v151 = vld [vmem:[%s1 + $0x98] sm:$0xff]
    %v152 = vld [vmem:[%s1 + $0xa0] sm:$0xff]
    %v153 = vld [vmem:[%s1 + $0xa8] sm:$0xff]
    %v154 = vld [vmem:[%s1 + $0xb0] sm:$0xff]
    %v155 = vld [vmem:[%s1 + $0xb8] sm:$0xff]
    %v156 = vld [vmem:[%s1 + $0xc0] sm:$0xff]
    %v157 = vld [vmem:[%s1 + $0xc8] sm:$0xff]
    %v158 = vld [vmem:[%s1 + $0xd0] sm:$0xff]
    %v159 = vld [vmem:[%s1 + $0xd8] sm:$0xff]
    %v160 = vld [vmem:[%s1 + $0xe0] sm:$0xff]
    %v161 = vld [vmem:[%s1 + $0xe8] sm:$0xff]
    %v162 = vld [vmem:[%s1 + $0xf0] sm:$0xff]
    %v163 = vld [vmem:[%s1 + $0xf8] sm:$0xff]
    %v164 = vld [vmem:[%s1 + $0x100] sm:$0xff]
    %v165 = vld [vmem:[%s1 + $0x108] sm:$0xff]
    %v166 = vld [vmem:[%s1 + $0x110] sm:$0xff]
    %v167 = vld [vmem:[%s1 + $0x118] sm:$0xff]
    %v168 = vld [vmem:[%s1 + $0x120] sm:$0xff]
    %v169 = vld [vmem:[%s1 + $0x128] sm:$0xff]
    %v170 = vld [vmem:[%s1 + $0x130] sm:$0xff]
    %v171 = vld [vmem:[%s1 + $0x138] sm:$0xff]
    %v172 = vld [vmem:[%s1 + $0x140] sm:$0xff]
    %v173 = vld [vmem:[%s1 + $0x148] sm:$0xff]
    %v174 = vld [vmem:[%s1 + $0x150] sm:$0xff]
    %v175 = vld [vmem:[%s1 + $0x158] sm:$0xff]
    %v176 = vld [vmem:[%s1 + $0x160] sm:$0xff]
    %v177 = vld [vmem:[%s1 + $0x168] sm:$0xff]
    %v178 = vld [vmem:[%s1 + $0x170] sm:$0xff]
    %v179 = vld [vmem:[%s1 + $0x178] sm:$0xff]
    %v180 = vld [vmem:[%s1 + $0x180] sm:$0xff]
    %v181 = vld [vmem:[%s1 + $0x188] sm:$0xff]
    %v182 = vld [vmem:[%s1 + $0x190] sm:$0xff]
    %v183 = vld [vmem:[%s1 + $0x198] sm:$0xff]
    %v184 = vld [vmem:[%s1 + $0x1a0] sm:$0xff]
    %v185 = vld [vmem:[%s1 + $0x1a8] sm:$0xff]
    %v186 = vld [vmem:[%s1 + $0x1b0] sm:$0xff]
    %v187 = vld [vmem:[%s1 + $0x1b8] sm:$0xff]
    %v188 = vld [vmem:[%s1 + $0x1c0] sm:$0xff]
    %v189 = vld [vmem:[%s1 + $0x1c8] sm:$0xff]
    %v190 = vld [vmem:[%s1 + $0x1d0] sm:$0xff]
    %v191 = vld [vmem:[%s1 + $0x1d8] sm:$0xff]
    %v192 = vld [vmem:[%s1 + $0x1e0] sm:$0xff]
    %v193 = vld [vmem:[%s1 + $0x1e8] sm:$0xff]
    %v194 = vld [vmem:[%s1 + $0x1f0] sm:$0xff]
    %v195 = vld [vmem:[%s1 + $0x1f8] sm:$0xff]
    %v196 = vld [vmem:[%s1 + $0x200] sm:$0xff]
    %v197 = vld [vmem:[%s1 + $0x208] sm:$0xff]
    %v198 = vld [vmem:[%s1 + $0x210] sm:$0xff]
    %v199 = vld [vmem:[%s1 + $0x218] sm:$0xff]
    %v200 = vld [vmem:[%s1 + $0x220] sm:$0xff]
    %v201 = vld [vmem:[%s1 + $0x228] sm:$0xff]
    %v202 = vld [vmem:[%s1 + $0x230] sm:$0xff]
    %v203 = vld [vmem:[%s1 + $0x238] sm:$0xff]
    %v204 = vld [vmem:[%s1 + $0x240] sm:$0xff]
    %v205 = vld [vmem:[%s1 + $0x248] sm:$0xff]
    %v206 = vld [vmem:[%s1 + $0x250] sm:$0xff]
    %v207 = vld [vmem:[%s1 + $0x258] sm:$0xff]
    %v208 = vld [vmem:[%s1 + $0x260] sm:$0xff]
    %v209 = vld [vmem:[%s1 + $0x268] sm:$0xff]
    %v210 = vld [vmem:[%s1 + $0x270] sm:$0xff]
    %v211 = vld [vmem:[%s1 + $0x278] sm:$0xff]
    %v212 = vld [vmem:[%s1 + $0x280] sm:$0xff]
    %v213 = vld [vmem:[%s1 + $0x288] sm:$0xff]
    %v214 = vld [vmem:[%s1 + $0x290] sm:$0xff]
    %v215 = vld [vmem:[%s1 + $0x298] sm:$0xff]
    %v216 = vld [vmem:[%s1 + $0x2a0] sm:$0xff]
    %v217 = vld [vmem:[%s1 + $0x2a8] sm:$0xff]
    %v218 = vld [vmem:[%s1 + $0x2b0] sm:$0xff]
    %v219 = vld [vmem:[%s1 + $0x2b8] sm:$0xff]
    %v220 = vld [vmem:[%s1 + $0x2c0] sm:$0xff]
    %v221 = vld [vmem:[%s1 + $0x2c8] sm:$0xff]
    %v222 = vld [vmem:[%s1 + $0x2d0] sm:$0xff]
    %v223 = vld [vmem:[%s1 + $0x2d8] sm:$0xff]
    %v224 = vld [vmem:[%s1 + $0x2e0] sm:$0xff]
    %v225 = vld [vmem:[%s1 + $0x2e8] sm:$0xff]
    %v226 = vld [vmem:[%s1 + $0x2f0] sm:$0xff]
    %v227 = vld [vmem:[%s1 + $0x2f8] sm:$0xff]
    %v228 = vld [vmem:[%s1 + $0x300] sm:$0xf]
    %v229 = vld [vmem:[%s1 + $0x308] sm:$0xf]
    %v230 = vld [vmem:[%s1 + $0x310] sm:$0xf]
    %v231 = vld [vmem:[%s1 + $0x318] sm:$0xf]
    %v232 = vadd.f32 %v32, %v132
    %v233 = vadd.f32 %v33, %v133
    %v234 = vadd.f32 %v34, %v134
    %v235 = vadd.f32 %v35, %v135
    %v236 = vadd.f32 %v36, %v136
    %v237 = vadd.f32 %v37, %v137
    %v238 = vadd.f32 %v38, %v138
    %v239 = vadd.f32 %v39, %v139
    %v240 = vadd.f32 %v40, %v140
    %v241 = vadd.f32 %v41, %v141
    %v242 = vadd.f32 %v42, %v142
    %v243 = vadd.f32 %v43, %v143
    %v244 = vadd.f32 %v44, %v144
    %v245 = vadd.f32 %v45, %v145
    %v246 = vadd.f32 %v46, %v146
    %v247 = vadd.f32 %v47, %v147
    %v248 = vadd.f32 %v48, %v148
    %v249 = vadd.f32 %v49, %v149
    %v250 = vadd.f32 %v50, %v150
    %v251 = vadd.f32 %v51, %v151
    %v252 = vadd.f32 %v52, %v152
    %v253 = vadd.f32 %v53, %v153
    %v254 = vadd.f32 %v54, %v154
    %v255 = vadd.f32 %v55, %v155
    %v256 = vadd.f32 %v56, %v156
    %v257 = vadd.f32 %v57, %v157
    %v258 = vadd.f32 %v58, %v158
    %v259 = vadd.f32 %v59, %v159
    %v260 = vadd.f32 %v60, %v160
    %v261 = vadd.f32 %v61, %v161
    %v262 = vadd.f32 %v62, %v162
    %v263 = vadd.f32 %v63, %v163
    %v264 = vadd.f32 %v64, %v164
    %v265 = vadd.f32 %v65, %v165
    %v266 = vadd.f32 %v66, %v166
    %v267 = vadd.f32 %v67, %v167
    %v268 = vadd.f32 %v68, %v168
    %v269 = vadd.f32 %v69, %v169
    %v270 = vadd.f32 %v70, %v170
    %v271 = vadd.f32 %v71, %v171
    %v272 = vadd.f32 %v72, %v172
    %v273 = vadd.f32 %v73, %v173
    %v274 = vadd.f32 %v74, %v174
    %v275 = vadd.f32 %v75, %v175
    %v276 = vadd.f32 %v76, %v176
    %v277 = vadd.f32 %v77, %v177
    %v278 = vadd.f32 %v78, %v178
    %v279 = vadd.f32 %v79, %v179
    %v280 = vadd.f32 %v80, %v180
    %v281 = vadd.f32 %v81, %v181
    %v282 = vadd.f32 %v82, %v182
    %v283 = vadd.f32 %v83, %v183
    %v284 = vadd.f32 %v84, %v184
    %v285 = vadd.f32 %v85, %v185
    %v286 = vadd.f32 %v86, %v186
    %v287 = vadd.f32 %v87, %v187
    %v288 = vadd.f32 %v88, %v188
    %v289 = vadd.f32 %v89, %v189
    %v290 = vadd.f32 %v90, %v190
    %v291 = vadd.f32 %v91, %v191
    %v292 = vadd.f32 %v92, %v192
    %v293 = vadd.f32 %v93, %v193
    %v294 = vadd.f32 %v94, %v194
    %v295 = vadd.f32 %v95, %v195
    %v296 = vadd.f32 %v96, %v196
    %v297 = vadd.f32 %v97, %v197
    %v298 = vadd.f32 %v98, %v198
    %v299 = vadd.f32 %v99, %v199
    %v300 = vadd.f32 %v100, %v200
    %v301 = vadd.f32 %v101, %v201
    %v302 = vadd.f32 %v102, %v202
    %v303 = vadd.f32 %v103, %v203
    %v304 = vadd.f32 %v104, %v204
    %v305 = vadd.f32 %v105, %v205
    %v306 = vadd.f32 %v106, %v206
    %v307 = vadd.f32 %v107, %v207
    %v308 = vadd.f32 %v108, %v208
    %v309 = vadd.f32 %v109, %v209
    %v310 = vadd.f32 %v110, %v210
    %v311 = vadd.f32 %v111, %v211
    %v312 = vadd.f32 %v112, %v212
    %v313 = vadd.f32 %v113, %v213
    %v314 = vadd.f32 %v114, %v214
    %v315 = vadd.f32 %v115, %v215
    %v316 = vadd.f32 %v116, %v216
    %v317 = vadd.f32 %v117, %v217
    %v318 = vadd.f32 %v118, %v218
    %v319 = vadd.f32 %v119, %v219
    %v320 = vadd.f32 %v120, %v220
    %v321 = vadd.f32 %v121, %v221
    %v322 = vadd.f32 %v122, %v222
    %v323 = vadd.f32 %v123, %v223
    %v324 = vadd.f32 %v124, %v224
    %v325 = vadd.f32 %v125, %v225
    %v326 = vadd.f32 %v126, %v226
    %v327 = vadd.f32 %v127, %v227
    %v328 = vadd.f32 %v128, %v228
    %v329 = vadd.f32 %v129, %v229
    %v330 = vadd.f32 %v130, %v230
    %v331 = vadd.f32 %v131, %v231
    %v332 = vadd.f32 %v232, %v233
    %v333 = vadd.f32 %v332, %v234
    %v334 = vadd.f32 %v333, %v235
    %335 = vadd.xlane.f32.xlu0 %v334
    %v336 = vpop.xlane.xlu0 %335
    %v337 = vadd.f32 %v236, %v237
    %v338 = vadd.f32 %v337, %v238
    %v339 = vadd.f32 %v338, %v239
    %340 = vadd.xlane.f32.xlu0 %v339
    %v341 = vpop.xlane.xlu0 %340
    %v342 = vadd.f32 %v240, %v241
    %v343 = vadd.f32 %v342, %v242
    %v344 = vadd.f32 %v343, %v243
    %345 = vadd.xlane.f32.xlu0 %v344
    %v346 = vpop.xlane.xlu0 %345
    %v347 = vadd.f32 %v244, %v245
    %v348 = vadd.f32 %v347, %v246
    %v349 = vadd.f32 %v348, %v247
    %350 = vadd.xlane.f32.xlu0 %v349
    %v351 = vpop.xlane.xlu0 %350
    %v352 = vadd.f32 %v248, %v249
    %v353 = vadd.f32 %v352, %v250
    %v354 = vadd.f32 %v353, %v251
    %355 = vadd.xlane.f32.xlu0 %v354
    %v356 = vpop.xlane.xlu0 %355
    %v357 = vadd.f32 %v252, %v253
    %v358 = vadd.f32 %v357, %v254
    %v359 = vadd.f32 %v358, %v255
    %360 = vadd.xlane.f32.xlu0 %v359
    %v361 = vpop.xlane.xlu0 %360
    %v362 = vadd.f32 %v256, %v257
    %v363 = vadd.f32 %v362, %v258
    %v364 = vadd.f32 %v363, %v259
    %365 = vadd.xlane.f32.xlu0 %v364
    %v366 = vpop.xlane.xlu0 %365
    %v367 = vadd.f32 %v260, %v261
    %v368 = vadd.f32 %v367, %v262
    %v369 = vadd.f32 %v368, %v263
    %370 = vadd.xlane.f32.xlu0 %v369
    %v371 = vpop.xlane.xlu0 %370
    %v372 = vadd.f32 %v264, %v265
    %v373 = vadd.f32 %v372, %v266
    %v374 = vadd.f32 %v373, %v267
    %375 = vadd.xlane.f32.xlu0 %v374
    %v376 = vpop.xlane.xlu0 %375
    %v377 = vadd.f32 %v268, %v269
    %v378 = vadd.f32 %v377, %v270
    %v379 = vadd.f32 %v378, %v271
    %380 = vadd.xlane.f32.xlu0 %v379
    %v381 = vpop.xlane.xlu0 %380
    %v382 = vadd.f32 %v272, %v273
    %v383 = vadd.f32 %v382, %v274
    %v384 = vadd.f32 %v383, %v275
    %385 = vadd.xlane.f32.xlu0 %v384
    %v386 = vpop.xlane.xlu0 %385
    %v387 = vadd.f32 %v276, %v277
    %v388 = vadd.f32 %v387, %v278
    %v389 = vadd.f32 %v388, %v279
    %390 = vadd.xlane.f32.xlu0 %v389
    %v391 = vpop.xlane.xlu0 %390
    %v392 = vadd.f32 %v280, %v281
    %v393 = vadd.f32 %v392, %v282
    %v394 = vadd.f32 %v393, %v283
    %395 = vadd.xlane.f32.xlu0 %v394
    %v396 = vpop.xlane.xlu0 %395
    %v397 = vadd.f32 %v284, %v285
    %v398 = vadd.f32 %v397, %v286
    %v399 = vadd.f32 %v398, %v287
    %400 = vadd.xlane.f32.xlu0 %v399
    %v401 = vpop.xlane.xlu0 %400
    %v402 = vadd.f32 %v288, %v289
    %v403 = vadd.f32 %v402, %v290
    %v404 = vadd.f32 %v403, %v291
    %405 = vadd.xlane.f32.xlu0 %v404
    %v406 = vpop.xlane.xlu0 %405
    %v407 = vadd.f32 %v292, %v293
    %v408 = vadd.f32 %v407, %v294
    %v409 = vadd.f32 %v408, %v295
    %410 = vadd.xlane.f32.xlu0 %v409
    %v411 = vpop.xlane.xlu0 %410
    %v412 = vadd.f32 %v296, %v297
    %v413 = vadd.f32 %v412, %v298
    %v414 = vadd.f32 %v413, %v299
    %415 = vadd.xlane.f32.xlu0 %v414
    %v416 = vpop.xlane.xlu0 %415
    %v417 = vadd.f32 %v300, %v301
    %v418 = vadd.f32 %v417, %v302
    %v419 = vadd.f32 %v418, %v303
    %420 = vadd.xlane.f32.xlu0 %v419
    %v421 = vpop.xlane.xlu0 %420
    %v422 = vadd.f32 %v304, %v305
    %v423 = vadd.f32 %v422, %v306
    %v424 = vadd.f32 %v423, %v307
    %425 = vadd.xlane.f32.xlu0 %v424
    %v426 = vpop.xlane.xlu0 %425
    %v427 = vadd.f32 %v308, %v309
    %v428 = vadd.f32 %v427, %v310
    %v429 = vadd.f32 %v428, %v311
    %430 = vadd.xlane.f32.xlu0 %v429
    %v431 = vpop.xlane.xlu0 %430
    %v432 = vadd.f32 %v312, %v313
    %v433 = vadd.f32 %v432, %v314
    %v434 = vadd.f32 %v433, %v315
    %435 = vadd.xlane.f32.xlu0 %v434
    %v436 = vpop.xlane.xlu0 %435
    %v437 = vadd.f32 %v316, %v317
    %v438 = vadd.f32 %v437, %v318
    %v439 = vadd.f32 %v438, %v319
    %440 = vadd.xlane.f32.xlu0 %v439
    %v441 = vpop.xlane.xlu0 %440
    %v442 = vadd.f32 %v320, %v321
    %v443 = vadd.f32 %v442, %v322
    %v444 = vadd.f32 %v443, %v323
    %445 = vadd.xlane.f32.xlu0 %v444
    %v446 = vpop.xlane.xlu0 %445
    %v447 = vadd.f32 %v324, %v325
    %v448 = vadd.f32 %v447, %v326
    %v449 = vadd.f32 %v448, %v327
    %450 = vadd.xlane.f32.xlu0 %v449
    %v451 = vpop.xlane.xlu0 %450
    %vm452 = vcmask 1043456
    %v453 = vsel %vm452, %v328, 0.0
    %v454 = vsel %vm452, %v329, 0.0
    %v455 = vadd.f32 %v453, %v454
    %v456 = vsel %vm452, %v330, 0.0
    %v457 = vadd.f32 %v455, %v456
    %v458 = vsel %vm452, %v331, 0.0
    %v459 = vadd.f32 %v457, %v458
    %460 = vadd.xlane.f32.xlu0 %v459
    %v461 = vpop.xlane.xlu0 %460
    %v462 = vmul.f32 %v232, %v232
    %v463 = vmul.f32 %v233, %v233
    %v464 = vmul.f32 %v234, %v234
    %v465 = vmul.f32 %v235, %v235
    %v466 = vmul.f32 %v236, %v236
    %v467 = vmul.f32 %v237, %v237
    %v468 = vmul.f32 %v238, %v238
    %v469 = vmul.f32 %v239, %v239
    %v470 = vmul.f32 %v240, %v240
    %v471 = vmul.f32 %v241, %v241
    %v472 = vmul.f32 %v242, %v242
    %v473 = vmul.f32 %v243, %v243
    %v474 = vmul.f32 %v244, %v244
    %v475 = vmul.f32 %v245, %v245
    %v476 = vmul.f32 %v246, %v246
    %v477 = vmul.f32 %v247, %v247
    %v478 = vmul.f32 %v248, %v248
    %v479 = vmul.f32 %v249, %v249
    %v480 = vmul.f32 %v250, %v250
    %v481 = vmul.f32 %v251, %v251
    %v482 = vmul.f32 %v252, %v252
    %v483 = vmul.f32 %v253, %v253
    %v484 = vmul.f32 %v254, %v254
    %v485 = vmul.f32 %v255, %v255
    %v486 = vmul.f32 %v256, %v256
    %v487 = vmul.f32 %v257, %v257
    %v488 = vmul.f32 %v258, %v258
    %v489 = vmul.f32 %v259, %v259
    %v490 = vmul.f32 %v260, %v260
    %v491 = vmul.f32 %v261, %v261
    %v492 = vmul.f32 %v262, %v262
    %v493 = vmul.f32 %v263, %v263
    %v494 = vmul.f32 %v264, %v264
    %v495 = vmul.f32 %v265, %v265
    %v496 = vmul.f32 %v266, %v266
    %v497 = vmul.f32 %v267, %v267
    %v498 = vmul.f32 %v268, %v268
    %v499 = vmul.f32 %v269, %v269
    %v500 = vmul.f32 %v270, %v270
    %v501 = vmul.f32 %v271, %v271
    %v502 = vmul.f32 %v272, %v272
    %v503 = vmul.f32 %v273, %v273
    %v504 = vmul.f32 %v274, %v274
    %v505 = vmul.f32 %v275, %v275
    %v506 = vmul.f32 %v276, %v276
    %v507 = vmul.f32 %v277, %v277
    %v508 = vmul.f32 %v278, %v278
    %v509 = vmul.f32 %v279, %v279
    %v510 = vmul.f32 %v280, %v280
    %v511 = vmul.f32 %v281, %v281
    %v512 = vmul.f32 %v282, %v282
    %v513 = vmul.f32 %v283, %v283
    %v514 = vmul.f32 %v284, %v284
    %v515 = vmul.f32 %v285, %v285
    %v516 = vmul.f32 %v286, %v286
    %v517 = vmul.f32 %v287, %v287
    %v518 = vmul.f32 %v288, %v288
    %v519 = vmul.f32 %v289, %v289
    %v520 = vmul.f32 %v290, %v290
    %v521 = vmul.f32 %v291, %v291
    %v522 = vmul.f32 %v292, %v292
    %v523 = vmul.f32 %v293, %v293
    %v524 = vmul.f32 %v294, %v294
    %v525 = vmul.f32 %v295, %v295
    %v526 = vmul.f32 %v296, %v296
    %v527 = vmul.f32 %v297, %v297
    %v528 = vmul.f32 %v298, %v298
    %v529 = vmul.f32 %v299, %v299
    %v530 = vmul.f32 %v300, %v300
    %v531 = vmul.f32 %v301, %v301
    %v532 = vmul.f32 %v302, %v302
    %v533 = vmul.f32 %v303, %v303
    %v534 = vmul.f32 %v304, %v304
    %v535 = vmul.f32 %v305, %v305
    %v536 = vmul.f32 %v306, %v306
    %v537 = vmul.f32 %v307, %v307
    %v538 = vmul.f32 %v308, %v308
    %v539 = vmul.f32 %v309, %v309
    %v540 = vmul.f32 %v310, %v310
    %v541 = vmul.f32 %v311, %v311
    %v542 = vmul.f32 %v312, %v312
    %v543 = vmul.f32 %v313, %v313
    %v544 = vmul.f32 %v314, %v314
    %v545 = vmul.f32 %v315, %v315
    %v546 = vmul.f32 %v316, %v316
    %v547 = vmul.f32 %v317, %v317
    %v548 = vmul.f32 %v318, %v318
    %v549 = vmul.f32 %v319, %v319
    %v550 = vmul.f32 %v320, %v320
    %v551 = vmul.f32 %v321, %v321
    %v552 = vmul.f32 %v322, %v322
    %v553 = vmul.f32 %v323, %v323
    %v554 = vmul.f32 %v324, %v324
    %v555 = vmul.f32 %v325, %v325
    %v556 = vmul.f32 %v326, %v326
    %v557 = vmul.f32 %v327, %v327
    %v558 = vmul.f32 %v328, %v328
    %v559 = vmul.f32 %v329, %v329
    %v560 = vmul.f32 %v330, %v330
    %v561 = vmul.f32 %v331, %v331
    %v562 = vadd.f32 %v462, %v463
    %v563 = vadd.f32 %v562, %v464
    %v564 = vadd.f32 %v563, %v465
    %565 = vadd.xlane.f32.xlu0 %v564
    %v566 = vpop.xlane.xlu0 %565
    %v567 = vadd.f32 %v466, %v467
    %v568 = vadd.f32 %v567, %v468
    %v569 = vadd.f32 %v568, %v469
    %570 = vadd.xlane.f32.xlu0 %v569
    %v571 = vpop.xlane.xlu0 %570
    %v572 = vadd.f32 %v470, %v471
    %v573 = vadd.f32 %v572, %v472
    %v574 = vadd.f32 %v573, %v473
    %575 = vadd.xlane.f32.xlu0 %v574
    %v576 = vpop.xlane.xlu0 %575
    %v577 = vadd.f32 %v474, %v475
    %v578 = vadd.f32 %v577, %v476
    %v579 = vadd.f32 %v578, %v477
    %580 = vadd.xlane.f32.xlu0 %v579
    %v581 = vpop.xlane.xlu0 %580
    %v582 = vadd.f32 %v478, %v479
    %v583 = vadd.f32 %v582, %v480
    %v584 = vadd.f32 %v583, %v481
    %585 = vadd.xlane.f32.xlu0 %v584
    %v586 = vpop.xlane.xlu0 %585
    %v587 = vadd.f32 %v482, %v483
    %v588 = vadd.f32 %v587, %v484
    %v589 = vadd.f32 %v588, %v485
    %590 = vadd.xlane.f32.xlu0 %v589
    %v591 = vpop.xlane.xlu0 %590
    %v592 = vadd.f32 %v486, %v487
    %v593 = vadd.f32 %v592, %v488
    %v594 = vadd.f32 %v593, %v489
    %595 = vadd.xlane.f32.xlu0 %v594
    %v596 = vpop.xlane.xlu0 %595
    %v597 = vadd.f32 %v490, %v491
    %v598 = vadd.f32 %v597, %v492
    %v599 = vadd.f32 %v598, %v493
    %600 = vadd.xlane.f32.xlu0 %v599
    %v601 = vpop.xlane.xlu0 %600
    %v602 = vadd.f32 %v494, %v495
    %v603 = vadd.f32 %v602, %v496
    %v604 = vadd.f32 %v603, %v497
    %605 = vadd.xlane.f32.xlu0 %v604
    %v606 = vpop.xlane.xlu0 %605
    %v607 = vadd.f32 %v498, %v499
    %v608 = vadd.f32 %v607, %v500
    %v609 = vadd.f32 %v608, %v501
    %610 = vadd.xlane.f32.xlu0 %v609
    %v611 = vpop.xlane.xlu0 %610
    %v612 = vadd.f32 %v502, %v503
    %v613 = vadd.f32 %v612, %v504
    %v614 = vadd.f32 %v613, %v505
    %615 = vadd.xlane.f32.xlu0 %v614
    %v616 = vpop.xlane.xlu0 %615
    %v617 = vadd.f32 %v506, %v507
    %v618 = vadd.f32 %v617, %v508
    %v619 = vadd.f32 %v618, %v509
    %620 = vadd.xlane.f32.xlu0 %v619
    %v621 = vpop.xlane.xlu0 %620
    %v622 = vadd.f32 %v510, %v511
    %v623 = vadd.f32 %v622, %v512
    %v624 = vadd.f32 %v623, %v513
    %625 = vadd.xlane.f32.xlu0 %v624
    %v626 = vpop.xlane.xlu0 %625
    %v627 = vadd.f32 %v514, %v515
    %v628 = vadd.f32 %v627, %v516
    %v629 = vadd.f32 %v628, %v517
    %630 = vadd.xlane.f32.xlu0 %v629
    %v631 = vpop.xlane.xlu0 %630
    %v632 = vadd.f32 %v518, %v519
    %v633 = vadd.f32 %v632, %v520
    %v634 = vadd.f32 %v633, %v521
    %635 = vadd.xlane.f32.xlu0 %v634
    %v636 = vpop.xlane.xlu0 %635
    %v637 = vadd.f32 %v522, %v523
    %v638 = vadd.f32 %v637, %v524
    %v639 = vadd.f32 %v638, %v525
    %640 = vadd.xlane.f32.xlu0 %v639
    %v641 = vpop.xlane.xlu0 %640
    %v642 = vadd.f32 %v526, %v527
    %v643 = vadd.f32 %v642, %v528
    %v644 = vadd.f32 %v643, %v529
    %645 = vadd.xlane.f32.xlu0 %v644
    %v646 = vpop.xlane.xlu0 %645
    %v647 = vadd.f32 %v530, %v531
    %v648 = vadd.f32 %v647, %v532
    %v649 = vadd.f32 %v648, %v533
    %650 = vadd.xlane.f32.xlu0 %v649
    %v651 = vpop.xlane.xlu0 %650
    %v652 = vadd.f32 %v534, %v535
    %v653 = vadd.f32 %v652, %v536
    %v654 = vadd.f32 %v653, %v537
    %655 = vadd.xlane.f32.xlu0 %v654
    %v656 = vpop.xlane.xlu0 %655
    %v657 = vadd.f32 %v538, %v539
    %v658 = vadd.f32 %v657, %v540
    %v659 = vadd.f32 %v658, %v541
    %660 = vadd.xlane.f32.xlu0 %v659
    %v661 = vpop.xlane.xlu0 %660
    %v662 = vadd.f32 %v542, %v543
    %v663 = vadd.f32 %v662, %v544
    %v664 = vadd.f32 %v663, %v545
    %665 = vadd.xlane.f32.xlu0 %v664
    %v666 = vpop.xlane.xlu0 %665
    %v667 = vadd.f32 %v546, %v547
    %v668 = vadd.f32 %v667, %v548
    %v669 = vadd.f32 %v668, %v549
    %670 = vadd.xlane.f32.xlu0 %v669
    %v671 = vpop.xlane.xlu0 %670
    %v672 = vadd.f32 %v550, %v551
    %v673 = vadd.f32 %v672, %v552
    %v674 = vadd.f32 %v673, %v553
    %675 = vadd.xlane.f32.xlu0 %v674
    %v676 = vpop.xlane.xlu0 %675
    %v677 = vadd.f32 %v554, %v555
    %v678 = vadd.f32 %v677, %v556
    %v679 = vadd.f32 %v678, %v557
    %680 = vadd.xlane.f32.xlu0 %v679
    %v681 = vpop.xlane.xlu0 %680
    %v682 = vsel %vm452, %v558, 0.0
    %v683 = vsel %vm452, %v559, 0.0
    %v684 = vadd.f32 %v682, %v683
    %v685 = vsel %vm452, %v560, 0.0
    %v686 = vadd.f32 %v684, %v685
    %v687 = vsel %vm452, %v561, 0.0
    %v688 = vadd.f32 %v686, %v687
    %689 = vadd.xlane.f32.xlu0 %v688
    %v690 = vpop.xlane.xlu0 %689
    %v691 = vmul.f32 %v336, 0.001953125
    %v692 = vmul.f32 %v341, 0.001953125
    %v693 = vmul.f32 %v346, 0.001953125
    %v694 = vmul.f32 %v351, 0.001953125
    %v695 = vmul.f32 %v356, 0.001953125
    %v696 = vmul.f32 %v361, 0.001953125
    %v697 = vmul.f32 %v366, 0.001953125
    %v698 = vmul.f32 %v371, 0.001953125
    %v699 = vmul.f32 %v376, 0.001953125
    %v700 = vmul.f32 %v381, 0.001953125
    %v701 = vmul.f32 %v386, 0.001953125
    %v702 = vmul.f32 %v391, 0.001953125
    %v703 = vmul.f32 %v396, 0.001953125
    %v704 = vmul.f32 %v401, 0.001953125
    %v705 = vmul.f32 %v406, 0.001953125
    %v706 = vmul.f32 %v411, 0.001953125
    %v707 = vmul.f32 %v416, 0.001953125
    %v708 = vmul.f32 %v421, 0.001953125
    %v709 = vmul.f32 %v426, 0.001953125
    %v710 = vmul.f32 %v431, 0.001953125
    %v711 = vmul.f32 %v436, 0.001953125
    %v712 = vmul.f32 %v441, 0.001953125
    %v713 = vmul.f32 %v446, 0.001953125
    %v714 = vmul.f32 %v451, 0.001953125
    %v715 = vmul.f32 %v461, 0.001953125
    %v716 = vmul.f32 %v566, 0.001953125
    %v717 = vmul.f32 %v571, 0.001953125
    %v718 = vmul.f32 %v576, 0.001953125
    %v719 = vmul.f32 %v581, 0.001953125
    %v720 = vmul.f32 %v586, 0.001953125
    %v721 = vmul.f32 %v591, 0.001953125
    %v722 = vmul.f32 %v596, 0.001953125
    %v723 = vmul.f32 %v601, 0.001953125
    %v724 = vmul.f32 %v606, 0.001953125
    %v725 = vmul.f32 %v611, 0.001953125
    %v726 = vmul.f32 %v616, 0.001953125
    %v727 = vmul.f32 %v621, 0.001953125
    %v728 = vmul.f32 %v626, 0.001953125
    %v729 = vmul.f32 %v631, 0.001953125
    %v730 = vmul.f32 %v636, 0.001953125
    %v731 = vmul.f32 %v641, 0.001953125
    %v732 = vmul.f32 %v646, 0.001953125
    %v733 = vmul.f32 %v651, 0.001953125
    %v734 = vmul.f32 %v656, 0.001953125
    %v735 = vmul.f32 %v661, 0.001953125
    %v736 = vmul.f32 %v666, 0.001953125
    %v737 = vmul.f32 %v671, 0.001953125
    %v738 = vmul.f32 %v676, 0.001953125
    %v739 = vmul.f32 %v681, 0.001953125
    %v740 = vmul.f32 %v690, 0.001953125
    %v741 = vmul.f32 %v691, %v691
    %v742 = vmul.f32 %v692, %v692
    %v743 = vmul.f32 %v693, %v693
    %v744 = vmul.f32 %v694, %v694
    %v745 = vmul.f32 %v695, %v695
    %v746 = vmul.f32 %v696, %v696
    %v747 = vmul.f32 %v697, %v697
    %v748 = vmul.f32 %v698, %v698
    %v749 = vmul.f32 %v699, %v699
    %v750 = vmul.f32 %v700, %v700
    %v751 = vmul.f32 %v701, %v701
    %v752 = vmul.f32 %v702, %v702
    %v753 = vmul.f32 %v703, %v703
    %v754 = vmul.f32 %v704, %v704
    %v755 = vmul.f32 %v705, %v705
    %v756 = vmul.f32 %v706, %v706
    %v757 = vmul.f32 %v707, %v707
    %v758 = vmul.f32 %v708, %v708
    %v759 = vmul.f32 %v709, %v709
    %v760 = vmul.f32 %v710, %v710
    %v761 = vmul.f32 %v711, %v711
    %v762 = vmul.f32 %v712, %v712
    %v763 = vmul.f32 %v713, %v713
    %v764 = vmul.f32 %v714, %v714
    %v765 = vmul.f32 %v715, %v715
    %v766 = vsub.f32 %v716, %v741
    %v767 = vsub.f32 %v717, %v742
    %v768 = vsub.f32 %v718, %v743
    %v769 = vsub.f32 %v719, %v744
    %v770 = vsub.f32 %v720, %v745
    %v771 = vsub.f32 %v721, %v746
    %v772 = vsub.f32 %v722, %v747
    %v773 = vsub.f32 %v723, %v748
    %v774 = vsub.f32 %v724, %v749
    %v775 = vsub.f32 %v725, %v750
    %v776 = vsub.f32 %v726, %v751
    %v777 = vsub.f32 %v727, %v752
    %v778 = vsub.f32 %v728, %v753
    %v779 = vsub.f32 %v729, %v754
    %v780 = vsub.f32 %v730, %v755
    %v781 = vsub.f32 %v731, %v756
    %v782 = vsub.f32 %v732, %v757
    %v783 = vsub.f32 %v733, %v758
    %v784 = vsub.f32 %v734, %v759
    %v785 = vsub.f32 %v735, %v760
    %v786 = vsub.f32 %v736, %v761
    %v787 = vsub.f32 %v737, %v762
    %v788 = vsub.f32 %v738, %v763
    %v789 = vsub.f32 %v739, %v764
    %v790 = vsub.f32 %v740, %v765
    %v791 = vadd.f32 %v766, 1e-05
    %v792 = vadd.f32 %v767, 1e-05
    %v793 = vadd.f32 %v768, 1e-05
    %v794 = vadd.f32 %v769, 1e-05
    %v795 = vadd.f32 %v770, 1e-05
    %v796 = vadd.f32 %v771, 1e-05
    %v797 = vadd.f32 %v772, 1e-05
    %v798 = vadd.f32 %v773, 1e-05
    %v799 = vadd.f32 %v774, 1e-05
    %v800 = vadd.f32 %v775, 1e-05
    %v801 = vadd.f32 %v776, 1e-05
    %v802 = vadd.f32 %v777, 1e-05
    %v803 = vadd.f32 %v778, 1e-05
    %v804 = vadd.f32 %v779, 1e-05
    %v805 = vadd.f32 %v780, 1e-05
    %v806 = vadd.f32 %v781, 1e-05
    %v807 = vadd.f32 %v782, 1e-05
    %v808 = vadd.f32 %v783, 1e-05
    %v809 = vadd.f32 %v784, 1e-05
    %v810 = vadd.f32 %v785, 1e-05
    %v811 = vadd.f32 %v786, 1e-05
    %v812 = vadd.f32 %v787, 1e-05
    %v813 = vadd.f32 %v788, 1e-05
    %v814 = vadd.f32 %v789, 1e-05
    %v815 = vadd.f32 %v790, 1e-05
    %v816 = vrsqrt.pop %v791
    %v817 = vrsqrt.pop %v792
    %v818 = vrsqrt.pop %v793
    %v819 = vrsqrt.pop %v794
    %v820 = vrsqrt.pop %v795
    %v821 = vrsqrt.pop %v796
    %v822 = vrsqrt.pop %v797
    %v823 = vrsqrt.pop %v798
    %v824 = vrsqrt.pop %v799
    %v825 = vrsqrt.pop %v800
    %v826 = vrsqrt.pop %v801
    %v827 = vrsqrt.pop %v802
    %v828 = vrsqrt.pop %v803
    %v829 = vrsqrt.pop %v804
    %v830 = vrsqrt.pop %v805
    %v831 = vrsqrt.pop %v806
    %v832 = vrsqrt.pop %v807
    %v833 = vrsqrt.pop %v808
    %v834 = vrsqrt.pop %v809
    %v835 = vrsqrt.pop %v810
    %v836 = vrsqrt.pop %v811
    %v837 = vrsqrt.pop %v812
    %v838 = vrsqrt.pop %v813
    %v839 = vrsqrt.pop %v814
    %v840 = vrsqrt.pop %v815
    %v841 = vld [vmem:[%s2] sm:$0xf]
    %v842 = vld [vmem:[%s3] sm:$0xf]
    %v843 = vsub.f32 %v232, %v691
    %v844 = vsub.f32 %v233, %v691
    %v845 = vsub.f32 %v234, %v691
    %v846 = vsub.f32 %v235, %v691
    %v847 = vsub.f32 %v236, %v692
    %v848 = vsub.f32 %v237, %v692
    %v849 = vsub.f32 %v238, %v692
    %v850 = vsub.f32 %v239, %v692
    %v851 = vsub.f32 %v240, %v693
    %v852 = vsub.f32 %v241, %v693
    %v853 = vsub.f32 %v242, %v693
    %v854 = vsub.f32 %v243, %v693
    %v855 = vsub.f32 %v244, %v694
    %v856 = vsub.f32 %v245, %v694
    %v857 = vsub.f32 %v246, %v694
    %v858 = vsub.f32 %v247, %v694
    %v859 = vsub.f32 %v248, %v695
    %v860 = vsub.f32 %v249, %v695
    %v861 = vsub.f32 %v250, %v695
    %v862 = vsub.f32 %v251, %v695
    %v863 = vsub.f32 %v252, %v696
    %v864 = vsub.f32 %v253, %v696
    %v865 = vsub.f32 %v254, %v696
    %v866 = vsub.f32 %v255, %v696
    %v867 = vsub.f32 %v256, %v697
    %v868 = vsub.f32 %v257, %v697
    %v869 = vsub.f32 %v258, %v697
    %v870 = vsub.f32 %v259, %v697
    %v871 = vsub.f32 %v260, %v698
    %v872 = vsub.f32 %v261, %v698
    %v873 = vsub.f32 %v262, %v698
    %v874 = vsub.f32 %v263, %v698
    %v875 = vsub.f32 %v264, %v699
    %v876 = vsub.f32 %v265, %v699
    %v877 = vsub.f32 %v266, %v699
    %v878 = vsub.f32 %v267, %v699
    %v879 = vsub.f32 %v268, %v700
    %v880 = vsub.f32 %v269, %v700
    %v881 = vsub.f32 %v270, %v700
    %v882 = vsub.f32 %v271, %v700
    %v883 = vsub.f32 %v272, %v701
    %v884 = vsub.f32 %v273, %v701
    %v885 = vsub.f32 %v274, %v701
    %v886 = vsub.f32 %v275, %v701
    %v887 = vsub.f32 %v276, %v702
    %v888 = vsub.f32 %v277, %v702
    %v889 = vsub.f32 %v278, %v702
    %v890 = vsub.f32 %v279, %v702
    %v891 = vsub.f32 %v280, %v703
    %v892 = vsub.f32 %v281, %v703
    %v893 = vsub.f32 %v282, %v703
    %v894 = vsub.f32 %v283, %v703
    %v895 = vsub.f32 %v284, %v704
    %v896 = vsub.f32 %v285, %v704
    %v897 = vsub.f32 %v286, %v704
    %v898 = vsub.f32 %v287, %v704
    %v899 = vsub.f32 %v288, %v705
    %v900 = vsub.f32 %v289, %v705
    %v901 = vsub.f32 %v290, %v705
    %v902 = vsub.f32 %v291, %v705
    %v903 = vsub.f32 %v292, %v706
    %v904 = vsub.f32 %v293, %v706
    %v905 = vsub.f32 %v294, %v706
    %v906 = vsub.f32 %v295, %v706
    %v907 = vsub.f32 %v296, %v707
    %v908 = vsub.f32 %v297, %v707
    %v909 = vsub.f32 %v298, %v707
    %v910 = vsub.f32 %v299, %v707
    %v911 = vsub.f32 %v300, %v708
    %v912 = vsub.f32 %v301, %v708
    %v913 = vsub.f32 %v302, %v708
    %v914 = vsub.f32 %v303, %v708
    %v915 = vsub.f32 %v304, %v709
    %v916 = vsub.f32 %v305, %v709
    %v917 = vsub.f32 %v306, %v709
    %v918 = vsub.f32 %v307, %v709
    %v919 = vsub.f32 %v308, %v710
    %v920 = vsub.f32 %v309, %v710
    %v921 = vsub.f32 %v310, %v710
    %v922 = vsub.f32 %v311, %v710
    %v923 = vsub.f32 %v312, %v711
    %v924 = vsub.f32 %v313, %v711
    %v925 = vsub.f32 %v314, %v711
    %v926 = vsub.f32 %v315, %v711
    %v927 = vsub.f32 %v316, %v712
    %v928 = vsub.f32 %v317, %v712
    %v929 = vsub.f32 %v318, %v712
    %v930 = vsub.f32 %v319, %v712
    %v931 = vsub.f32 %v320, %v713
    %v932 = vsub.f32 %v321, %v713
    %v933 = vsub.f32 %v322, %v713
    %v934 = vsub.f32 %v323, %v713
    %v935 = vsub.f32 %v324, %v714
    %v936 = vsub.f32 %v325, %v714
    %v937 = vsub.f32 %v326, %v714
    %v938 = vsub.f32 %v327, %v714
    %v939 = vsub.f32 %v328, %v715
    %v940 = vsub.f32 %v329, %v715
    %v941 = vsub.f32 %v330, %v715
    %v942 = vsub.f32 %v331, %v715
    %v943 = vmul.f32 %v843, %v816
    %v944 = vmul.f32 %v844, %v816
    %v945 = vmul.f32 %v845, %v816
    %v946 = vmul.f32 %v846, %v816
    %v947 = vmul.f32 %v847, %v817
    %v948 = vmul.f32 %v848, %v817
    %v949 = vmul.f32 %v849, %v817
    %v950 = vmul.f32 %v850, %v817
    %v951 = vmul.f32 %v851, %v818
    %v952 = vmul.f32 %v852, %v818
    %v953 = vmul.f32 %v853, %v818
    %v954 = vmul.f32 %v854, %v818
    %v955 = vmul.f32 %v855, %v819
    %v956 = vmul.f32 %v856, %v819
    %v957 = vmul.f32 %v857, %v819
    %v958 = vmul.f32 %v858, %v819
    %v959 = vmul.f32 %v859, %v820
    %v960 = vmul.f32 %v860, %v820
    %v961 = vmul.f32 %v861, %v820
    %v962 = vmul.f32 %v862, %v820
    %v963 = vmul.f32 %v863, %v821
    %v964 = vmul.f32 %v864, %v821
    %v965 = vmul.f32 %v865, %v821
    %v966 = vmul.f32 %v866, %v821
    %v967 = vmul.f32 %v867, %v822
    %v968 = vmul.f32 %v868, %v822
    %v969 = vmul.f32 %v869, %v822
    %v970 = vmul.f32 %v870, %v822
    %v971 = vmul.f32 %v871, %v823
    %v972 = vmul.f32 %v872, %v823
    %v973 = vmul.f32 %v873, %v823
    %v974 = vmul.f32 %v874, %v823
    %v975 = vmul.f32 %v875, %v824
    %v976 = vmul.f32 %v876, %v824
    %v977 = vmul.f32 %v877, %v824
    %v978 = vmul.f32 %v878, %v824
    %v979 = vmul.f32 %v879, %v825
    %v980 = vmul.f32 %v880, %v825
    %v981 = vmul.f32 %v881, %v825
    %v982 = vmul.f32 %v882, %v825
    %v983 = vmul.f32 %v883, %v826
    %v984 = vmul.f32 %v884, %v826
    %v985 = vmul.f32 %v885, %v826
    %v986 = vmul.f32 %v886, %v826
    %v987 = vmul.f32 %v887, %v827
    %v988 = vmul.f32 %v888, %v827
    %v989 = vmul.f32 %v889, %v827
    %v990 = vmul.f32 %v890, %v827
    %v991 = vmul.f32 %v891, %v828
    %v992 = vmul.f32 %v892, %v828
    %v993 = vmul.f32 %v893, %v828
    %v994 = vmul.f32 %v894, %v828
    %v995 = vmul.f32 %v895, %v829
    %v996 = vmul.f32 %v896, %v829
    %v997 = vmul.f32 %v897, %v829
    %v998 = vmul.f32 %v898, %v829
    %v999 = vmul.f32 %v899, %v830
    %v1000 = vmul.f32 %v900, %v830
    %v1001 = vmul.f32 %v901, %v830
    %v1002 = vmul.f32 %v902, %v830
    %v1003 = vmul.f32 %v903, %v831
    %v1004 = vmul.f32 %v904, %v831
    %v1005 = vmul.f32 %v905, %v831
    %v1006 = vmul.f32 %v906, %v831
    %v1007 = vmul.f32 %v907, %v832
    %v1008 = vmul.f32 %v908, %v832
    %v1009 = vmul.f32 %v909, %v832
    %v1010 = vmul.f32 %v910, %v832
    %v1011 = vmul.f32 %v911, %v833
    %v1012 = vmul.f32 %v912, %v833
    %v1013 = vmul.f32 %v913, %v833
    %v1014 = vmul.f32 %v914, %v833
    %v1015 = vmul.f32 %v915, %v834
    %v1016 = vmul.f32 %v916, %v834
    %v1017 = vmul.f32 %v917, %v834
    %v1018 = vmul.f32 %v918, %v834
    %v1019 = vmul.f32 %v919, %v835
    %v1020 = vmul.f32 %v920, %v835
    %v1021 = vmul.f32 %v921, %v835
    %v1022 = vmul.f32 %v922, %v835
    %v1023 = vmul.f32 %v923, %v836
    %v1024 = vmul.f32 %v924, %v836
    %v1025 = vmul.f32 %v925, %v836
    %v1026 = vmul.f32 %v926, %v836
    %v1027 = vmul.f32 %v927, %v837
    %v1028 = vmul.f32 %v928, %v837
    %v1029 = vmul.f32 %v929, %v837
    %v1030 = vmul.f32 %v930, %v837
    %v1031 = vmul.f32 %v931, %v838
    %v1032 = vmul.f32 %v932, %v838
    %v1033 = vmul.f32 %v933, %v838
    %v1034 = vmul.f32 %v934, %v838
    %v1035 = vmul.f32 %v935, %v839
    %v1036 = vmul.f32 %v936, %v839
    %v1037 = vmul.f32 %v937, %v839
    %v1038 = vmul.f32 %v938, %v839
    %v1039 = vmul.f32 %v939, %v840
    %v1040 = vmul.f32 %v940, %v840
    %v1041 = vmul.f32 %v941, %v840
    %v1042 = vmul.f32 %v942, %v840
    %v1044 = vlaneseq
    %v1045 = vshrl.u32 %v1044, 7
    %v1046 = vsub.s32 0, %v1045
    %v1047 = vrot.slane %v841, %v1046
    %v1048 = vlaneseq
    %v1049 = vshrl.u32 %v1048, 7
    %v1050 = vsub.s32 1, %v1049
    %v1051 = vrot.slane %v841, %v1050
    %v1052 = vlaneseq
    %v1053 = vshrl.u32 %v1052, 7
    %v1054 = vsub.s32 2, %v1053
    %v1055 = vrot.slane %v841, %v1054
    %v1056 = vlaneseq
    %v1057 = vshrl.u32 %v1056, 7
    %v1058 = vsub.s32 3, %v1057
    %v1059 = vrot.slane %v841, %v1058
    %v1064 = vmul.f32 %v943, %v1047
    %v1065 = vmul.f32 %v944, %v1051
    %v1066 = vmul.f32 %v945, %v1055
    %v1067 = vmul.f32 %v946, %v1059
    %v1068 = vmul.f32 %v947, %v1047
    %v1069 = vmul.f32 %v948, %v1051
    %v1070 = vmul.f32 %v949, %v1055
    %v1071 = vmul.f32 %v950, %v1059
    %v1072 = vmul.f32 %v951, %v1047
    %v1073 = vmul.f32 %v952, %v1051
    %v1074 = vmul.f32 %v953, %v1055
    %v1075 = vmul.f32 %v954, %v1059
    %v1076 = vmul.f32 %v955, %v1047
    %v1077 = vmul.f32 %v956, %v1051
    %v1078 = vmul.f32 %v957, %v1055
    %v1079 = vmul.f32 %v958, %v1059
    %v1080 = vmul.f32 %v959, %v1047
    %v1081 = vmul.f32 %v960, %v1051
    %v1082 = vmul.f32 %v961, %v1055
    %v1083 = vmul.f32 %v962, %v1059
    %v1084 = vmul.f32 %v963, %v1047
    %v1085 = vmul.f32 %v964, %v1051
    %v1086 = vmul.f32 %v965, %v1055
    %v1087 = vmul.f32 %v966, %v1059
    %v1088 = vmul.f32 %v967, %v1047
    %v1089 = vmul.f32 %v968, %v1051
    %v1090 = vmul.f32 %v969, %v1055
    %v1091 = vmul.f32 %v970, %v1059
    %v1092 = vmul.f32 %v971, %v1047
    %v1093 = vmul.f32 %v972, %v1051
    %v1094 = vmul.f32 %v973, %v1055
    %v1095 = vmul.f32 %v974, %v1059
    %v1096 = vmul.f32 %v975, %v1047
    %v1097 = vmul.f32 %v976, %v1051
    %v1098 = vmul.f32 %v977, %v1055
    %v1099 = vmul.f32 %v978, %v1059
    %v1100 = vmul.f32 %v979, %v1047
    %v1101 = vmul.f32 %v980, %v1051
    %v1102 = vmul.f32 %v981, %v1055
    %v1103 = vmul.f32 %v982, %v1059
    %v1104 = vmul.f32 %v983, %v1047
    %v1105 = vmul.f32 %v984, %v1051
    %v1106 = vmul.f32 %v985, %v1055
    %v1107 = vmul.f32 %v986, %v1059
    %v1108 = vmul.f32 %v987, %v1047
    %v1109 = vmul.f32 %v988, %v1051
    %v1110 = vmul.f32 %v989, %v1055
    %v1111 = vmul.f32 %v990, %v1059
    %v1112 = vmul.f32 %v991, %v1047
    %v1113 = vmul.f32 %v992, %v1051
    %v1114 = vmul.f32 %v993, %v1055
    %v1115 = vmul.f32 %v994, %v1059
    %v1116 = vmul.f32 %v995, %v1047
    %v1117 = vmul.f32 %v996, %v1051
    %v1118 = vmul.f32 %v997, %v1055
    %v1119 = vmul.f32 %v998, %v1059
    %v1120 = vmul.f32 %v999, %v1047
    %v1121 = vmul.f32 %v1000, %v1051
    %v1122 = vmul.f32 %v1001, %v1055
    %v1123 = vmul.f32 %v1002, %v1059
    %v1124 = vmul.f32 %v1003, %v1047
    %v1125 = vmul.f32 %v1004, %v1051
    %v1126 = vmul.f32 %v1005, %v1055
    %v1127 = vmul.f32 %v1006, %v1059
    %v1128 = vmul.f32 %v1007, %v1047
    %v1129 = vmul.f32 %v1008, %v1051
    %v1130 = vmul.f32 %v1009, %v1055
    %v1131 = vmul.f32 %v1010, %v1059
    %v1132 = vmul.f32 %v1011, %v1047
    %v1133 = vmul.f32 %v1012, %v1051
    %v1134 = vmul.f32 %v1013, %v1055
    %v1135 = vmul.f32 %v1014, %v1059
    %v1136 = vmul.f32 %v1015, %v1047
    %v1137 = vmul.f32 %v1016, %v1051
    %v1138 = vmul.f32 %v1017, %v1055
    %v1139 = vmul.f32 %v1018, %v1059
    %v1140 = vmul.f32 %v1019, %v1047
    %v1141 = vmul.f32 %v1020, %v1051
    %v1142 = vmul.f32 %v1021, %v1055
    %v1143 = vmul.f32 %v1022, %v1059
    %v1144 = vmul.f32 %v1023, %v1047
    %v1145 = vmul.f32 %v1024, %v1051
    %v1146 = vmul.f32 %v1025, %v1055
    %v1147 = vmul.f32 %v1026, %v1059
    %v1148 = vmul.f32 %v1027, %v1047
    %v1149 = vmul.f32 %v1028, %v1051
    %v1150 = vmul.f32 %v1029, %v1055
    %v1151 = vmul.f32 %v1030, %v1059
    %v1152 = vmul.f32 %v1031, %v1047
    %v1153 = vmul.f32 %v1032, %v1051
    %v1154 = vmul.f32 %v1033, %v1055
    %v1155 = vmul.f32 %v1034, %v1059
    %v1156 = vmul.f32 %v1035, %v1047
    %v1157 = vmul.f32 %v1036, %v1051
    %v1158 = vmul.f32 %v1037, %v1055
    %v1159 = vmul.f32 %v1038, %v1059
    %v1160 = vmul.f32 %v1039, %v1047
    %v1161 = vmul.f32 %v1040, %v1051
    %v1162 = vmul.f32 %v1041, %v1055
    %v1163 = vmul.f32 %v1042, %v1059
    %v1165 = vlaneseq
    %v1166 = vshrl.u32 %v1165, 7
    %v1167 = vsub.s32 0, %v1166
    %v1168 = vrot.slane %v842, %v1167
    %v1169 = vlaneseq
    %v1170 = vshrl.u32 %v1169, 7
    %v1171 = vsub.s32 1, %v1170
    %v1172 = vrot.slane %v842, %v1171
    %v1173 = vlaneseq
    %v1174 = vshrl.u32 %v1173, 7
    %v1175 = vsub.s32 2, %v1174
    %v1176 = vrot.slane %v842, %v1175
    %v1177 = vlaneseq
    %v1178 = vshrl.u32 %v1177, 7
    %v1179 = vsub.s32 3, %v1178
    %v1180 = vrot.slane %v842, %v1179
    %v1185 = vadd.f32 %v1064, %v1168
    %v1186 = vadd.f32 %v1065, %v1172
    %v1187 = vadd.f32 %v1066, %v1176
    %v1188 = vadd.f32 %v1067, %v1180
    %v1189 = vadd.f32 %v1068, %v1168
    %v1190 = vadd.f32 %v1069, %v1172
    %v1191 = vadd.f32 %v1070, %v1176
    %v1192 = vadd.f32 %v1071, %v1180
    %v1193 = vadd.f32 %v1072, %v1168
    %v1194 = vadd.f32 %v1073, %v1172
    %v1195 = vadd.f32 %v1074, %v1176
    %v1196 = vadd.f32 %v1075, %v1180
    %v1197 = vadd.f32 %v1076, %v1168
    %v1198 = vadd.f32 %v1077, %v1172
    %v1199 = vadd.f32 %v1078, %v1176
    %v1200 = vadd.f32 %v1079, %v1180
    %v1201 = vadd.f32 %v1080, %v1168
    %v1202 = vadd.f32 %v1081, %v1172
    %v1203 = vadd.f32 %v1082, %v1176
    %v1204 = vadd.f32 %v1083, %v1180
    %v1205 = vadd.f32 %v1084, %v1168
    %v1206 = vadd.f32 %v1085, %v1172
    %v1207 = vadd.f32 %v1086, %v1176
    %v1208 = vadd.f32 %v1087, %v1180
    %v1209 = vadd.f32 %v1088, %v1168
    %v1210 = vadd.f32 %v1089, %v1172
    %v1211 = vadd.f32 %v1090, %v1176
    %v1212 = vadd.f32 %v1091, %v1180
    %v1213 = vadd.f32 %v1092, %v1168
    %v1214 = vadd.f32 %v1093, %v1172
    %v1215 = vadd.f32 %v1094, %v1176
    %v1216 = vadd.f32 %v1095, %v1180
    %v1217 = vadd.f32 %v1096, %v1168
    %v1218 = vadd.f32 %v1097, %v1172
    %v1219 = vadd.f32 %v1098, %v1176
    %v1220 = vadd.f32 %v1099, %v1180
    %v1221 = vadd.f32 %v1100, %v1168
    %v1222 = vadd.f32 %v1101, %v1172
    %v1223 = vadd.f32 %v1102, %v1176
    %v1224 = vadd.f32 %v1103, %v1180
    %v1225 = vadd.f32 %v1104, %v1168
    %v1226 = vadd.f32 %v1105, %v1172
    %v1227 = vadd.f32 %v1106, %v1176
    %v1228 = vadd.f32 %v1107, %v1180
    %v1229 = vadd.f32 %v1108, %v1168
    %v1230 = vadd.f32 %v1109, %v1172
    %v1231 = vadd.f32 %v1110, %v1176
    %v1232 = vadd.f32 %v1111, %v1180
    %v1233 = vadd.f32 %v1112, %v1168
    %v1234 = vadd.f32 %v1113, %v1172
    %v1235 = vadd.f32 %v1114, %v1176
    %v1236 = vadd.f32 %v1115, %v1180
    %v1237 = vadd.f32 %v1116, %v1168
    %v1238 = vadd.f32 %v1117, %v1172
    %v1239 = vadd.f32 %v1118, %v1176
    %v1240 = vadd.f32 %v1119, %v1180
    %v1241 = vadd.f32 %v1120, %v1168
    %v1242 = vadd.f32 %v1121, %v1172
    %v1243 = vadd.f32 %v1122, %v1176
    %v1244 = vadd.f32 %v1123, %v1180
    %v1245 = vadd.f32 %v1124, %v1168
    %v1246 = vadd.f32 %v1125, %v1172
    %v1247 = vadd.f32 %v1126, %v1176
    %v1248 = vadd.f32 %v1127, %v1180
    %v1249 = vadd.f32 %v1128, %v1168
    %v1250 = vadd.f32 %v1129, %v1172
    %v1251 = vadd.f32 %v1130, %v1176
    %v1252 = vadd.f32 %v1131, %v1180
    %v1253 = vadd.f32 %v1132, %v1168
    %v1254 = vadd.f32 %v1133, %v1172
    %v1255 = vadd.f32 %v1134, %v1176
    %v1256 = vadd.f32 %v1135, %v1180
    %v1257 = vadd.f32 %v1136, %v1168
    %v1258 = vadd.f32 %v1137, %v1172
    %v1259 = vadd.f32 %v1138, %v1176
    %v1260 = vadd.f32 %v1139, %v1180
    %v1261 = vadd.f32 %v1140, %v1168
    %v1262 = vadd.f32 %v1141, %v1172
    %v1263 = vadd.f32 %v1142, %v1176
    %v1264 = vadd.f32 %v1143, %v1180
    %v1265 = vadd.f32 %v1144, %v1168
    %v1266 = vadd.f32 %v1145, %v1172
    %v1267 = vadd.f32 %v1146, %v1176
    %v1268 = vadd.f32 %v1147, %v1180
    %v1269 = vadd.f32 %v1148, %v1168
    %v1270 = vadd.f32 %v1149, %v1172
    %v1271 = vadd.f32 %v1150, %v1176
    %v1272 = vadd.f32 %v1151, %v1180
    %v1273 = vadd.f32 %v1152, %v1168
    %v1274 = vadd.f32 %v1153, %v1172
    %v1275 = vadd.f32 %v1154, %v1176
    %v1276 = vadd.f32 %v1155, %v1180
    %v1277 = vadd.f32 %v1156, %v1168
    %v1278 = vadd.f32 %v1157, %v1172
    %v1279 = vadd.f32 %v1158, %v1176
    %v1280 = vadd.f32 %v1159, %v1180
    %v1281 = vadd.f32 %v1160, %v1168
    %v1282 = vadd.f32 %v1161, %v1172
    %v1283 = vadd.f32 %v1162, %v1176
    %v1284 = vadd.f32 %v1163, %v1180
    %1285 = vst [vmem:[#allocation5] sm:$0xff] %v1185
    %1286 = vst [vmem:[#allocation5 + $0x8] sm:$0xff] %v1186
    %1287 = vst [vmem:[#allocation5 + $0x10] sm:$0xff] %v1187
    %1288 = vst [vmem:[#allocation5 + $0x18] sm:$0xff] %v1188
    %1289 = vst [vmem:[#allocation5 + $0x20] sm:$0xff] %v1189
    %1290 = vst [vmem:[#allocation5 + $0x28] sm:$0xff] %v1190
    %1291 = vst [vmem:[#allocation5 + $0x30] sm:$0xff] %v1191
    %1292 = vst [vmem:[#allocation5 + $0x38] sm:$0xff] %v1192
    %1293 = vst [vmem:[#allocation5 + $0x40] sm:$0xff] %v1193
    %1294 = vst [vmem:[#allocation5 + $0x48] sm:$0xff] %v1194
    %1295 = vst [vmem:[#allocation5 + $0x50] sm:$0xff] %v1195
    %1296 = vst [vmem:[#allocation5 + $0x58] sm:$0xff] %v1196
    %1297 = vst [vmem:[#allocation5 + $0x60] sm:$0xff] %v1197
    %1298 = vst [vmem:[#allocation5 + $0x68] sm:$0xff] %v1198
    %1299 = vst [vmem:[#allocation5 + $0x70] sm:$0xff] %v1199
    %1300 = vst [vmem:[#allocation5 + $0x78] sm:$0xff] %v1200
    %1301 = vst [vmem:[#allocation5 + $0x80] sm:$0xff] %v1201
    %1302 = vst [vmem:[#allocation5 + $0x88] sm:$0xff] %v1202
    %1303 = vst [vmem:[#allocation5 + $0x90] sm:$0xff] %v1203
    %1304 = vst [vmem:[#allocation5 + $0x98] sm:$0xff] %v1204
    %1305 = vst [vmem:[#allocation5 + $0xa0] sm:$0xff] %v1205
    %1306 = vst [vmem:[#allocation5 + $0xa8] sm:$0xff] %v1206
    %1307 = vst [vmem:[#allocation5 + $0xb0] sm:$0xff] %v1207
    %1308 = vst [vmem:[#allocation5 + $0xb8] sm:$0xff] %v1208
    %1309 = vst [vmem:[#allocation5 + $0xc0] sm:$0xff] %v1209
    %1310 = vst [vmem:[#allocation5 + $0xc8] sm:$0xff] %v1210
    %1311 = vst [vmem:[#allocation5 + $0xd0] sm:$0xff] %v1211
    %1312 = vst [vmem:[#allocation5 + $0xd8] sm:$0xff] %v1212
    %1313 = vst [vmem:[#allocation5 + $0xe0] sm:$0xff] %v1213
    %1314 = vst [vmem:[#allocation5 + $0xe8] sm:$0xff] %v1214
    %1315 = vst [vmem:[#allocation5 + $0xf0] sm:$0xff] %v1215
    %1316 = vst [vmem:[#allocation5 + $0xf8] sm:$0xff] %v1216
    %1317 = vst [vmem:[#allocation5 + $0x100] sm:$0xff] %v1217
    %1318 = vst [vmem:[#allocation5 + $0x108] sm:$0xff] %v1218
    %1319 = vst [vmem:[#allocation5 + $0x110] sm:$0xff] %v1219
    %1320 = vst [vmem:[#allocation5 + $0x118] sm:$0xff] %v1220
    %1321 = vst [vmem:[#allocation5 + $0x120] sm:$0xff] %v1221
    %1322 = vst [vmem:[#allocation5 + $0x128] sm:$0xff] %v1222
    %1323 = vst [vmem:[#allocation5 + $0x130] sm:$0xff] %v1223
    %1324 = vst [vmem:[#allocation5 + $0x138] sm:$0xff] %v1224
    %1325 = vst [vmem:[#allocation5 + $0x140] sm:$0xff] %v1225
    %1326 = vst [vmem:[#allocation5 + $0x148] sm:$0xff] %v1226
    %1327 = vst [vmem:[#allocation5 + $0x150] sm:$0xff] %v1227
    %1328 = vst [vmem:[#allocation5 + $0x158] sm:$0xff] %v1228
    %1329 = vst [vmem:[#allocation5 + $0x160] sm:$0xff] %v1229
    %1330 = vst [vmem:[#allocation5 + $0x168] sm:$0xff] %v1230
    %1331 = vst [vmem:[#allocation5 + $0x170] sm:$0xff] %v1231
    %1332 = vst [vmem:[#allocation5 + $0x178] sm:$0xff] %v1232
    %1333 = vst [vmem:[#allocation5 + $0x180] sm:$0xff] %v1233
    %1334 = vst [vmem:[#allocation5 + $0x188] sm:$0xff] %v1234
    %1335 = vst [vmem:[#allocation5 + $0x190] sm:$0xff] %v1235
    %1336 = vst [vmem:[#allocation5 + $0x198] sm:$0xff] %v1236
    %1337 = vst [vmem:[#allocation5 + $0x1a0] sm:$0xff] %v1237
    %1338 = vst [vmem:[#allocation5 + $0x1a8] sm:$0xff] %v1238
    %1339 = vst [vmem:[#allocation5 + $0x1b0] sm:$0xff] %v1239
    %1340 = vst [vmem:[#allocation5 + $0x1b8] sm:$0xff] %v1240
    %1341 = vst [vmem:[#allocation5 + $0x1c0] sm:$0xff] %v1241
    %1342 = vst [vmem:[#allocation5 + $0x1c8] sm:$0xff] %v1242
    %1343 = vst [vmem:[#allocation5 + $0x1d0] sm:$0xff] %v1243
    %1344 = vst [vmem:[#allocation5 + $0x1d8] sm:$0xff] %v1244
    %1345 = vst [vmem:[#allocation5 + $0x1e0] sm:$0xff] %v1245
    %1346 = vst [vmem:[#allocation5 + $0x1e8] sm:$0xff] %v1246
    %1347 = vst [vmem:[#allocation5 + $0x1f0] sm:$0xff] %v1247
    %1348 = vst [vmem:[#allocation5 + $0x1f8] sm:$0xff] %v1248
    %1349 = vst [vmem:[#allocation5 + $0x200] sm:$0xff] %v1249
    %1350 = vst [vmem:[#allocation5 + $0x208] sm:$0xff] %v1250
    %1351 = vst [vmem:[#allocation5 + $0x210] sm:$0xff] %v1251
    %1352 = vst [vmem:[#allocation5 + $0x218] sm:$0xff] %v1252
    %1353 = vst [vmem:[#allocation5 + $0x220] sm:$0xff] %v1253
    %1354 = vst [vmem:[#allocation5 + $0x228] sm:$0xff] %v1254
    %1355 = vst [vmem:[#allocation5 + $0x230] sm:$0xff] %v1255
    %1356 = vst [vmem:[#allocation5 + $0x238] sm:$0xff] %v1256
    %1357 = vst [vmem:[#allocation5 + $0x240] sm:$0xff] %v1257
    %1358 = vst [vmem:[#allocation5 + $0x248] sm:$0xff] %v1258
    %1359 = vst [vmem:[#allocation5 + $0x250] sm:$0xff] %v1259
    %1360 = vst [vmem:[#allocation5 + $0x258] sm:$0xff] %v1260
    %1361 = vst [vmem:[#allocation5 + $0x260] sm:$0xff] %v1261
    %1362 = vst [vmem:[#allocation5 + $0x268] sm:$0xff] %v1262
    %1363 = vst [vmem:[#allocation5 + $0x270] sm:$0xff] %v1263
    %1364 = vst [vmem:[#allocation5 + $0x278] sm:$0xff] %v1264
    %1365 = vst [vmem:[#allocation5 + $0x280] sm:$0xff] %v1265
    %1366 = vst [vmem:[#allocation5 + $0x288] sm:$0xff] %v1266
    %1367 = vst [vmem:[#allocation5 + $0x290] sm:$0xff] %v1267
    %1368 = vst [vmem:[#allocation5 + $0x298] sm:$0xff] %v1268
    %1369 = vst [vmem:[#allocation5 + $0x2a0] sm:$0xff] %v1269
    %1370 = vst [vmem:[#allocation5 + $0x2a8] sm:$0xff] %v1270
    %1371 = vst [vmem:[#allocation5 + $0x2b0] sm:$0xff] %v1271
    %1372 = vst [vmem:[#allocation5 + $0x2b8] sm:$0xff] %v1272
    %1373 = vst [vmem:[#allocation5 + $0x2c0] sm:$0xff] %v1273
    %1374 = vst [vmem:[#allocation5 + $0x2c8] sm:$0xff] %v1274
    %1375 = vst [vmem:[#allocation5 + $0x2d0] sm:$0xff] %v1275
    %1376 = vst [vmem:[#allocation5 + $0x2d8] sm:$0xff] %v1276
    %1377 = vst [vmem:[#allocation5 + $0x2e0] sm:$0xff] %v1277
    %1378 = vst [vmem:[#allocation5 + $0x2e8] sm:$0xff] %v1278
    %1379 = vst [vmem:[#allocation5 + $0x2f0] sm:$0xff] %v1279
    %1380 = vst [vmem:[#allocation5 + $0x2f8] sm:$0xff] %v1280
    %1381 = vst [vmem:[#allocation5 + $0x300] sm:$0xf] %v1281
    %1382 = vst [vmem:[#allocation5 + $0x308] sm:$0xf] %v1282
    %1383 = vst [vmem:[#allocation5 + $0x310] sm:$0xf] %v1283
    %1384 = vst [vmem:[#allocation5 + $0x318] sm:$0xf] %v1284
    // Predicated region
    $region22: #{tpu_custom_call.1} parent=1 // pred_check
      _
    $region23: #{tpu_custom_call.1} parent=1 // pred_check_branch
      %1386 = sbr.rel (0) target = $region25
    $region24: #{tpu_custom_call.1} parent=1 // pred_region
      %s1388 = ssub.s32 12800, 12800
      %1389 = vsyncadd [#allocation4], %s1388
      %s1390 = sshll.u32 [#allocation5], 4
      %s1391 = int_to_ptr.vmem [resolvable:$true] %s1390
      %1396 = dma.vmem_to_hbm [thread:$0]  %s1391, 12800, %s4, [#allocation4], 512, 512, 32
    $region25: #{tpu_custom_call.1} parent=1 // pred_fallthru
      _
    // Predicated region
    $region26: #{tpu_custom_call.1} parent=1 // pred_check
      _
    $region27: #{tpu_custom_call.1} parent=1 // pred_check_branch
      %1398 = sbr.rel (0) target = $region29
    $region28: #{tpu_custom_call.1} parent=1 // pred_region
      %1399 = dma.done [#allocation4], 12800
    $region29: #{tpu_custom_call.1} parent=1 // pred_fallthru
      _
    %1400 = vsyncpa [#allocation3], 1
    %1401 = vsyncpa [#allocation4], 1

</llo_original>
